<compile_context>
chip_gen: v7x
topology: tpu7x:2x2x1
jax: 0.10.0
libtpu: 0.0.40
codegen_flags: <defaults>
</compile_context>

<pallas_src>
import jax
import jax.numpy as jnp
from jax.experimental import pallas as pl
from jax.experimental.pallas import tpu as pltpu

NEG_INF = -1e30


def pointer_kernel(wa_ref, wb_ref, wc_ref, wf_ref,
                   m1_ref, m2_ref, m3_ref, feat_ref, mask_ref, y_ref):
    # wa/wb/wc: (2, d)   wf: (2, nf)   fused head weights
    #   row 0 -> w1 head, row 1 -> w2 head (zero row where a source is unused)
    # m1/m2/m3: (1, d, TL)   feat: (1, nf, TL)   channels-first activation tiles
    # mask:     (1, 1, TL)   float mask (lane-dense)
    # y:        (1, 2, TL)   masked logits for both heads
    acc = jnp.dot(wa_ref[...], m1_ref[0, :, :],
                  preferred_element_type=jnp.float32)
    acc += jnp.dot(wb_ref[...], m2_ref[0, :, :],
                   preferred_element_type=jnp.float32)
    acc += jnp.dot(wc_ref[...], m3_ref[0, :, :],
                   preferred_element_type=jnp.float32)
    acc += jnp.dot(wf_ref[...], feat_ref[0, :, :],
                   preferred_element_type=jnp.float32)
    m = mask_ref[0, :, :].astype(jnp.float32)        # (1, TL), broadcast to heads
    # f32 epilogue: -1e30 is not representable in bf16, keep blend in f32.
    y_ref[0, :, :] = acc * m + (1.0 - m) * NEG_INF


def _pick_l_tile(L, target=512):
    """Choose the L (lane) tile.  Returns (TL, padded_L)."""
    if L <= target:
        return L, L                      # single full-length tile, no padding
    if L % target == 0:
        return target, L
    # prefer a dividing, 128-aligned tile (no padding needed)
    for t in (1024, 896, 768, 640, 512, 384, 256, 128):
        if L % t == 0:
            return t, L
    Lp = pl.cdiv(L, target) * target     # fall back to zero-padding L
    return target, Lp


def pointer_forward(M1, M2, M3, mask, feat_ner, w1, w2, *, l_tile=512):
    """Equivalent of Pointer.forward.

    M1, M2, M3: (B, d_model, L)   feat_ner: (B, nf=64, L)   mask: (B, L)
    w1, w2:     (2*d_model + nf,) conv1x1 weights (no bias)
    Returns (Y1, Y2), each (B, L) float32.
    """
    B, d, L = M1.shape
    nf = feat_ner.shape[1]
    C_total = 2 * d + nf
    assert w1.shape == (C_total,) and w2.shape == (C_total,)

    act_dtype = M1.dtype

    # Fuse the two conv1x1 heads into small per-source (2, C) weight blocks.
    zeros_d = jnp.zeros((d,), jnp.float32)
    Wa = jnp.stack([w1[0:d], w2[0:d]]).astype(act_dtype)          # M1  -> both heads
    Wb = jnp.stack([w1[d:2 * d], zeros_d]).astype(act_dtype)      # M2  -> head 1 only
    Wc = jnp.stack([zeros_d, w2[d:2 * d]]).astype(act_dtype)      # M3  -> head 2 only
    Wf = jnp.stack([w1[2 * d:], w2[2 * d:]]).astype(act_dtype)    # feat -> both heads

    TL, Lp = _pick_l_tile(L, l_tile)
    mask3 = mask.astype(jnp.float32).reshape(B, 1, L)
    if Lp != L:
        pad = ((0, 0), (0, 0), (0, Lp - L))
        M1 = jnp.pad(M1, pad)
        M2 = jnp.pad(M2, pad)
        M3 = jnp.pad(M3, pad)
        feat_ner = jnp.pad(feat_ner, pad)
        mask3 = jnp.pad(mask3, pad)          # padded tail: mask = 0, sliced off below

    grid = (B, Lp // TL)

    def act_spec(c):
        return pl.BlockSpec((1, c, TL), lambda b, l: (b, 0, l))

    def w_spec(c):
        # constant block index -> Pallas keeps the tiny weights resident
        return pl.BlockSpec((2, c), lambda b, l: (0, 0))

    itemsize = jnp.dtype(act_dtype).itemsize
    cost = pl.CostEstimate(
        flops=2 * B * Lp * 2 * (2 * d + nf),
        transcendentals=0,
        bytes_accessed=B * Lp * ((3 * d + nf) * itemsize + 4) + B * Lp * 2 * 4,
    )

    out = pl.pallas_call(
        pointer_kernel,
        out_shape=jax.ShapeDtypeStruct((B, 2, Lp), jnp.float32),
        grid_spec=pltpu.PrefetchScalarGridSpec(
            num_scalar_prefetch=0,
            grid=grid,
            in_specs=[
                w_spec(d), w_spec(d), w_spec(d), w_spec(nf),
                act_spec(d), act_spec(d), act_spec(d), act_spec(nf),
                pl.BlockSpec((1, 1, TL), lambda b, l: (b, 0, l)),
            ],
            out_specs=pl.BlockSpec((1, 2, TL), lambda b, l: (b, 0, l)),
        ),
        compiler_params=pltpu.CompilerParams(
            dimension_semantics=("parallel", "parallel")),
        cost_estimate=cost,
    )(Wa, Wb, Wc, Wf, M1, M2, M3, feat_ner, mask3)

    Y1 = out[:, 0, :L]
    Y2 = out[:, 1, :L]
    # NOTE: PyTorch `.squeeze()` + mask broadcast yields the same (B, L) values;
    # we always return (B, L) (torch returns (L,)-shaped intermediates for B==1
    # but the masked result broadcasts back against the (B, L) mask).
    return Y1, Y2


if __name__ == "__main__":
    key = jax.random.PRNGKey(0)
    B, d_model, L = 2, 32, 16
    k1, k2, k3, k4, k5, k6, k7 = jax.random.split(key, 7)

    M1 = jax.random.normal(k1, (B, d_model, L), jnp.float32)
    M2 = jax.random.normal(k2, (B, d_model, L), jnp.float32)
    M3 = jax.random.normal(k3, (B, d_model, L), jnp.float32)
    feat_ner = jax.random.normal(k4, (B, 64, L), jnp.float32)
    mask = (jax.random.uniform(k5, (B, L)) > 0.3).astype(jnp.float32)

    # Conv-style init (PyTorch uniform(-1/sqrt(fan_in), +1/sqrt(fan_in)))
    C_in = 2 * d_model + 64
    bound = 1.0 / (C_in ** 0.5)
    w1 = jax.random.uniform(k6, (C_in,), jnp.float32, -bound, bound)
    w2 = jax.random.uniform(k7, (C_in,), jnp.float32, -bound, bound)

    Y1, Y2 = pointer_forward(M1, M2, M3, mask, feat_ner, w1, w2)
    jax.block_until_ready((Y1, Y2))

    # Pure-JAX reference of the PyTorch forward
    X1 = jnp.concatenate([M1, M2, feat_ner], axis=1)
    X2 = jnp.concatenate([M1, M3, feat_ner], axis=1)
    r1 = jnp.einsum("bcl,c->bl", X1, w1) * mask + (1.0 - mask) * NEG_INF
    r2 = jnp.einsum("bcl,c->bl", X2, w2) * mask + (1.0 - mask) * NEG_INF
    assert jnp.allclose(Y1, r1, rtol=1e-3, atol=1e-3), "Y1 mismatch"
    assert jnp.allclose(Y2, r2, rtol=1e-3, atol=1e-3), "Y2 mismatch"

    print("KERNEL_OK")
</pallas_src>

<mosaic_0001>
module attributes {stable_mosaic.version = 11 : i64} {
  func.func @pointer_kernel(%arg0: i32, %arg1: i32, %arg2: memref<2x32xf32, #tpu.memory_space<vmem>>, %arg3: memref<2x32xf32, #tpu.memory_space<vmem>>, %arg4: memref<2x32xf32, #tpu.memory_space<vmem>>, %arg5: memref<2x64xf32, #tpu.memory_space<vmem>>, %arg6: memref<1x32x16xf32, #tpu.memory_space<vmem>>, %arg7: memref<1x32x16xf32, #tpu.memory_space<vmem>>, %arg8: memref<1x32x16xf32, #tpu.memory_space<vmem>>, %arg9: memref<1x64x16xf32, #tpu.memory_space<vmem>>, %arg10: memref<1x1x16xf32, #tpu.memory_space<vmem>>, %arg11: memref<1x2x16xf32, #tpu.memory_space<vmem>>) attributes {dimension_semantics = [#tpu.dimension_semantics<parallel>, #tpu.dimension_semantics<parallel>], iteration_bounds = array<i64: 2, 1>, scalar_prefetch = 0 : i64, scratch_operands = 0 : i64, tpu.core_type = #tpu.core_type<tc>, window_params = [{pipeline_mode = #tpu.pipeline_mode<synchronous>, transform_indices = @transform_0, window_bounds = array<i64: 2, 32>}, {pipeline_mode = #tpu.pipeline_mode<synchronous>, transform_indices = @transform_1, window_bounds = array<i64: 2, 32>}, {pipeline_mode = #tpu.pipeline_mode<synchronous>, transform_indices = @transform_2, window_bounds = array<i64: 2, 32>}, {pipeline_mode = #tpu.pipeline_mode<synchronous>, transform_indices = @transform_3, window_bounds = array<i64: 2, 64>}, {transform_indices = @transform_4, window_bounds = array<i64: 1, 32, 16>}, {transform_indices = @transform_5, window_bounds = array<i64: 1, 32, 16>}, {transform_indices = @transform_6, window_bounds = array<i64: 1, 32, 16>}, {transform_indices = @transform_7, window_bounds = array<i64: 1, 64, 16>}, {transform_indices = @transform_8, window_bounds = array<i64: 1, 1, 16>}, {transform_indices = @transform_9, window_bounds = array<i64: 1, 2, 16>}]} {
    %c0 = arith.constant 0 : index
    %c0_0 = arith.constant 0 : index
    %0 = vector.load %arg2[%c0, %c0_0] : memref<2x32xf32, #tpu.memory_space<vmem>>, vector<2x32xf32>
    %c0_1 = arith.constant 0 : index
    %c0_2 = arith.constant 0 : index
    %c0_3 = arith.constant 0 : index
    %1 = vector.load %arg6[%c0_1, %c0_2, %c0_3] : memref<1x32x16xf32, #tpu.memory_space<vmem>>, vector<1x32x16xf32>
    %2 = vector.shape_cast %1 : vector<1x32x16xf32> to vector<32x16xf32>
    %cst = arith.constant dense<0.000000e+00> : vector<2x16xf32>
    %3 = tpu.matmul %0, %2, %cst {dimension_numbers = #tpu.dot_dimension_numbers<[1], [0], [0], [1], [0, 0, 1, 1], [], []>} : vector<2x32xf32>, vector<32x16xf32>, vector<2x16xf32> -> vector<2x16xf32>
    %c0_4 = arith.constant 0 : index
    %c0_5 = arith.constant 0 : index
    %4 = vector.load %arg3[%c0_4, %c0_5] : memref<2x32xf32, #tpu.memory_space<vmem>>, vector<2x32xf32>
    %c0_6 = arith.constant 0 : index
    %c0_7 = arith.constant 0 : index
    %c0_8 = arith.constant 0 : index
    %5 = vector.load %arg7[%c0_6, %c0_7, %c0_8] : memref<1x32x16xf32, #tpu.memory_space<vmem>>, vector<1x32x16xf32>
    %6 = vector.shape_cast %5 : vector<1x32x16xf32> to vector<32x16xf32>
    %cst_9 = arith.constant dense<0.000000e+00> : vector<2x16xf32>
    %7 = tpu.matmul %4, %6, %cst_9 {dimension_numbers = #tpu.dot_dimension_numbers<[1], [0], [0], [1], [0, 0, 1, 1], [], []>} : vector<2x32xf32>, vector<32x16xf32>, vector<2x16xf32> -> vector<2x16xf32>
    %8 = arith.addf %3, %7 : vector<2x16xf32>
    %c0_10 = arith.constant 0 : index
    %c0_11 = arith.constant 0 : index
    %9 = vector.load %arg4[%c0_10, %c0_11] : memref<2x32xf32, #tpu.memory_space<vmem>>, vector<2x32xf32>
    %c0_12 = arith.constant 0 : index
    %c0_13 = arith.constant 0 : index
    %c0_14 = arith.constant 0 : index
    %10 = vector.load %arg8[%c0_12, %c0_13, %c0_14] : memref<1x32x16xf32, #tpu.memory_space<vmem>>, vector<1x32x16xf32>
    %11 = vector.shape_cast %10 : vector<1x32x16xf32> to vector<32x16xf32>
    %cst_15 = arith.constant dense<0.000000e+00> : vector<2x16xf32>
    %12 = tpu.matmul %9, %11, %cst_15 {dimension_numbers = #tpu.dot_dimension_numbers<[1], [0], [0], [1], [0, 0, 1, 1], [], []>} : vector<2x32xf32>, vector<32x16xf32>, vector<2x16xf32> -> vector<2x16xf32>
    %13 = arith.addf %8, %12 : vector<2x16xf32>
    %c0_16 = arith.constant 0 : index
    %c0_17 = arith.constant 0 : index
    %14 = vector.load %arg5[%c0_16, %c0_17] : memref<2x64xf32, #tpu.memory_space<vmem>>, vector<2x64xf32>
    %c0_18 = arith.constant 0 : index
    %c0_19 = arith.constant 0 : index
    %c0_20 = arith.constant 0 : index
    %15 = vector.load %arg9[%c0_18, %c0_19, %c0_20] : memref<1x64x16xf32, #tpu.memory_space<vmem>>, vector<1x64x16xf32>
    %16 = vector.shape_cast %15 : vector<1x64x16xf32> to vector<64x16xf32>
    %cst_21 = arith.constant dense<0.000000e+00> : vector<2x16xf32>
    %17 = tpu.matmul %14, %16, %cst_21 {dimension_numbers = #tpu.dot_dimension_numbers<[1], [0], [0], [1], [0, 0, 1, 1], [], []>} : vector<2x64xf32>, vector<64x16xf32>, vector<2x16xf32> -> vector<2x16xf32>
    %18 = arith.addf %13, %17 : vector<2x16xf32>
    %c0_22 = arith.constant 0 : index
    %c0_23 = arith.constant 0 : index
    %c0_24 = arith.constant 0 : index
    %19 = vector.load %arg10[%c0_22, %c0_23, %c0_24] : memref<1x1x16xf32, #tpu.memory_space<vmem>>, vector<1x1x16xf32>
    %20 = vector.shape_cast %19 : vector<1x1x16xf32> to vector<1x16xf32>
    %21 = vector.broadcast %20 : vector<1x16xf32> to vector<2x16xf32>
    %22 = arith.mulf %18, %21 : vector<2x16xf32>
    %cst_25 = arith.constant 1.000000e+00 : f32
    %23 = vector.broadcast %cst_25 : f32 to vector<1x16xf32>
    %24 = arith.subf %23, %20 : vector<1x16xf32>
    %cst_26 = arith.constant -1.000000e+30 : f32
    %25 = vector.broadcast %cst_26 : f32 to vector<1x16xf32>
    %26 = arith.mulf %24, %25 : vector<1x16xf32>
    %27 = vector.broadcast %26 : vector<1x16xf32> to vector<2x16xf32>
    %28 = arith.addf %22, %27 : vector<2x16xf32>
    %c0_27 = arith.constant 0 : index
    %c0_28 = arith.constant 0 : index
    %c0_29 = arith.constant 0 : index
    %29 = vector.load %arg11[%c0_27, %c0_28, %c0_29] : memref<1x2x16xf32, #tpu.memory_space<vmem>>, vector<1x2x16xf32>
    %30 = vector.shape_cast %29 : vector<1x2x16xf32> to vector<2x16xf32>
    %31 = vector.shape_cast %28 : vector<2x16xf32> to vector<1x2x16xf32>
    tpu.vector_store %arg11[%c0_27, %c0_28, %c0_29], %31 {strides = array<i32>} : memref<1x2x16xf32, #tpu.memory_space<vmem>>, vector<1x2x16xf32>,
    return
  }
  func.func @transform_0(%arg0: i32, %arg1: i32) -> (i32, i32) {
    %c0_i32 = arith.constant 0 : i32
    %c0_i32_0 = arith.constant 0 : i32
    %c0_i32_1 = arith.constant 0 : i32
    return %c0_i32, %c0_i32_0 : i32, i32
  }
  func.func @transform_1(%arg0: i32, %arg1: i32) -> (i32, i32) {
    %c0_i32 = arith.constant 0 : i32
    %c0_i32_0 = arith.constant 0 : i32
    %c0_i32_1 = arith.constant 0 : i32
    return %c0_i32, %c0_i32_0 : i32, i32
  }
  func.func @transform_2(%arg0: i32, %arg1: i32) -> (i32, i32) {
    %c0_i32 = arith.constant 0 : i32
    %c0_i32_0 = arith.constant 0 : i32
    %c0_i32_1 = arith.constant 0 : i32
    return %c0_i32, %c0_i32_0 : i32, i32
  }
  func.func @transform_3(%arg0: i32, %arg1: i32) -> (i32, i32) {
    %c0_i32 = arith.constant 0 : i32
    %c0_i32_0 = arith.constant 0 : i32
    %c0_i32_1 = arith.constant 0 : i32
    return %c0_i32, %c0_i32_0 : i32, i32
  }
  func.func @transform_4(%arg0: i32, %arg1: i32) -> (i32, i32, i32) {
    %c0_i32 = arith.constant 0 : i32
    %c0_i32_0 = arith.constant 0 : i32
    return %arg0, %c0_i32, %arg1 : i32, i32, i32
  }
  func.func @transform_5(%arg0: i32, %arg1: i32) -> (i32, i32, i32) {
    %c0_i32 = arith.constant 0 : i32
    %c0_i32_0 = arith.constant 0 : i32
    return %arg0, %c0_i32, %arg1 : i32, i32, i32
  }
  func.func @transform_6(%arg0: i32, %arg1: i32) -> (i32, i32, i32) {
    %c0_i32 = arith.constant 0 : i32
    %c0_i32_0 = arith.constant 0 : i32
    return %arg0, %c0_i32, %arg1 : i32, i32, i32
  }
  func.func @transform_7(%arg0: i32, %arg1: i32) -> (i32, i32, i32) {
    %c0_i32 = arith.constant 0 : i32
    %c0_i32_0 = arith.constant 0 : i32
    return %arg0, %c0_i32, %arg1 : i32, i32, i32
  }
  func.func @transform_8(%arg0: i32, %arg1: i32) -> (i32, i32, i32) {
    %c0_i32 = arith.constant 0 : i32
    %c0_i32_0 = arith.constant 0 : i32
    return %arg0, %c0_i32, %arg1 : i32, i32, i32
  }
  func.func @transform_9(%arg0: i32, %arg1: i32) -> (i32, i32, i32) {
    %c0_i32 = arith.constant 0 : i32
    %c0_i32_0 = arith.constant 0 : i32
    return %arg0, %c0_i32, %arg1 : i32, i32, i32
  }
}

</mosaic_0001>

<llo_original>
// kernel: tpu_custom_call.1
$region0: #{tpu_custom_call.1}
  #allocation0 [shape = 'u32[]', space=smem, size = 0x4, offset = 0x4, fixed_abs, tag = 'smem constant byte address 0x4 - core index']
  #allocation1 [shape = 'u32[144,128]{1,0:T(1,128)}', space=vmem, size = 0x12000, scoped, tag = 'internal scratch']
  %s0 = inlined_call_operand.vmem [shape: f32[2,32], index: 0, kind: input, shape index: {}]
  %s1 = inlined_call_operand.vmem [shape: f32[2,32], index: 1, kind: input, shape index: {}]
  %s2 = inlined_call_operand.vmem [shape: f32[2,32], index: 2, kind: input, shape index: {}]
  %s3 = inlined_call_operand.vmem [shape: f32[2,64], index: 3, kind: input, shape index: {}]
  %s4 = inlined_call_operand.vmem [shape: f32[2,32,16], index: 4, kind: input, shape index: {}]
  %s5 = inlined_call_operand.vmem [shape: f32[2,32,16], index: 5, kind: input, shape index: {}]
  %s6 = inlined_call_operand.vmem [shape: f32[2,32,16], index: 6, kind: input, shape index: {}]
  %s7 = inlined_call_operand.vmem [shape: f32[2,64,16], index: 7, kind: input, shape index: {}]
  %s8 = inlined_call_operand.vmem [shape: f32[2,1,16], index: 8, kind: input, shape index: {}]
  %s9 = inlined_call_operand.hbm [shape: f32[2,2,16], index: 9, kind: output, shape index: {}]
  %s10 = sld [smem:[#allocation0]]
  $region69: #{tpu_custom_call.1} parent=0
    _
  %s12 = ssub.s32 1, %s10
  %s13 = scalar_select 0, %s12, %s10
  $region1: #{tpu_custom_call.1} parent=0
    #allocation2 [shape = 'u8[2048]{0}', space=vmem, size = 0x800, scoped, tag = 'output window, operand 0']
    #allocation3 [shape = 's32[2]{0}', space=sflag, size = 0x8, scoped, tag = 'scoped memory for tpu_custom_call.1']
    %14 = vsyncpa [#allocation3], 0
    %s15 = scalar_lea.sflag [#allocation3], 1
    %16 = vsyncpa %s15, 0
    loop: start=0, step=1, limit=4
    $region2: #{tpu_custom_call.1} parent=1 // loop_pre_header
      _
    $region3: #{tpu_custom_call.1} parent=1 // loop_header
      %s18 = sphi 0, %s22
      %p19 = scmp.ge.s32.totalorder %s18, 4
      %s25 = sphi 0, %s37
      %s26 = sphi 0, %s33
      %s27 = sphi 0, %s25
      %s28 = sphi 0, %s26
      %s29 = sphi 0, %s27
      %s30 = sphi 0, %s28
      %s38 = sphi 0, %s38
      %s40 = sphi 0, %s38
      %s41 = sphi 0, %s40
      %s55 = sphi 0, %s41
      %s59 = sphi 0, %s59
      %s61 = sphi 0, %s59
      %s62 = sphi 0, %s61
      %s76 = sphi 0, %s62
      %s80 = sphi 0, %s80
      %s82 = sphi 0, %s80
      %s83 = sphi 0, %s82
      %s97 = sphi 0, %s83
      %s101 = sphi 0, %s101
      %s103 = sphi 0, %s101
      %s104 = sphi 0, %s103
      %s118 = sphi 0, %s104
      %s126 = sphi 0, %s128
      %s129 = sphi 0, %s126
      %s130 = sphi 0, %s129
      %s146 = sphi 0, %s130
      %s154 = sphi 0, %s156
      %s157 = sphi 0, %s154
      %s158 = sphi 0, %s157
      %s174 = sphi 0, %s158
      %s182 = sphi 0, %s184
      %s185 = sphi 0, %s182
      %s186 = sphi 0, %s185
      %s202 = sphi 0, %s186
      %s210 = sphi 0, %s212
      %s213 = sphi 0, %s210
      %s214 = sphi 0, %s213
      %s230 = sphi 0, %s214
      %s238 = sphi 0, %s240
      %s241 = sphi 0, %s238
      %s242 = sphi 0, %s241
      %s258 = sphi 0, %s242
      %s266 = sphi 0, %s268
      %s269 = sphi 0, %s266
      %s270 = sphi 0, %s269
      %s286 = sphi 0, %s270
    $region4: #{tpu_custom_call.1} parent=1 // loop_header_branch
      %21 = sbr.rel (%p19) target = $region8
    $region5: #{tpu_custom_call.1} parent=1 // loop_body
      %s23 = ssub.s32 %s18, 1
      %s24 = ssub.s32 %s18, 2
      %s31 = sadd.s32 1, %s26
      %p32 = scmp.ge.s32.totalorder %s31, 1
      %s33 = scalar_select %p32, 0, %s31
      %s34 = sadd.s32 1, %s25
      %s35 = scalar_select %p32, %s34, %s25
      %p36 = scmp.ge.s32.totalorder %s35, 2
      %s37 = scalar_select %p36, 0, %s35
      %s39 = sadd.s32 %s38, 1
      %p42 = scmp.eq.s32.totalorder %s18, 1
      %p43 = scmp.ne.s32.totalorder %s38, %s40
      %p44 = scmp.eq.s32.totalorder %s18, 0
      %p45 = por %p43, %p44
      %p46 = scmp.ne.s32.totalorder %s38, %s40
      %p47 = scmp.eq.s32.totalorder %s23, 1
      %p48 = por %p46, %p47
      %p49 = scmp.ne.s32.totalorder %s40, %s41
      %p50 = scmp.eq.s32.totalorder %s23, 0
      %p51 = por %p49, %p50
      %p52 = scmp.ne.s32.totalorder %s40, %s41
      %p53 = scmp.eq.s32.totalorder %s24, 1
      %p54 = por %p52, %p53
      %p56 = scmp.ne.s32.totalorder %s41, %s55
      %p57 = scmp.eq.s32.totalorder %s24, 0
      %p58 = por %p56, %p57
      %s60 = sadd.s32 %s59, 1
      %p63 = scmp.eq.s32.totalorder %s18, 1
      %p64 = scmp.ne.s32.totalorder %s59, %s61
      %p65 = scmp.eq.s32.totalorder %s18, 0
      %p66 = por %p64, %p65
      %p67 = scmp.ne.s32.totalorder %s59, %s61
      %p68 = scmp.eq.s32.totalorder %s23, 1
      %p69 = por %p67, %p68
      %p70 = scmp.ne.s32.totalorder %s61, %s62
      %p71 = scmp.eq.s32.totalorder %s23, 0
      %p72 = por %p70, %p71
      %p73 = scmp.ne.s32.totalorder %s61, %s62
      %p74 = scmp.eq.s32.totalorder %s24, 1
      %p75 = por %p73, %p74
      %p77 = scmp.ne.s32.totalorder %s62, %s76
      %p78 = scmp.eq.s32.totalorder %s24, 0
      %p79 = por %p77, %p78
      %s81 = sadd.s32 %s80, 1
      %p84 = scmp.eq.s32.totalorder %s18, 1
      %p85 = scmp.ne.s32.totalorder %s80, %s82
      %p86 = scmp.eq.s32.totalorder %s18, 0
      %p87 = por %p85, %p86
      %p88 = scmp.ne.s32.totalorder %s80, %s82
      %p89 = scmp.eq.s32.totalorder %s23, 1
      %p90 = por %p88, %p89
      %p91 = scmp.ne.s32.totalorder %s82, %s83
      %p92 = scmp.eq.s32.totalorder %s23, 0
      %p93 = por %p91, %p92
      %p94 = scmp.ne.s32.totalorder %s82, %s83
      %p95 = scmp.eq.s32.totalorder %s24, 1
      %p96 = por %p94, %p95
      %p98 = scmp.ne.s32.totalorder %s83, %s97
      %p99 = scmp.eq.s32.totalorder %s24, 0
      %p100 = por %p98, %p99
      %s102 = sadd.s32 %s101, 1
      %p105 = scmp.eq.s32.totalorder %s18, 1
      %p106 = scmp.ne.s32.totalorder %s101, %s103
      %p107 = scmp.eq.s32.totalorder %s18, 0
      %p108 = por %p106, %p107
      %p109 = scmp.ne.s32.totalorder %s101, %s103
      %p110 = scmp.eq.s32.totalorder %s23, 1
      %p111 = por %p109, %p110
      %p112 = scmp.ne.s32.totalorder %s103, %s104
      %p113 = scmp.eq.s32.totalorder %s23, 0
      %p114 = por %p112, %p113
      %p115 = scmp.ne.s32.totalorder %s103, %s104
      %p116 = scmp.eq.s32.totalorder %s24, 1
      %p117 = por %p115, %p116
      %p119 = scmp.ne.s32.totalorder %s104, %s118
      %p120 = scmp.eq.s32.totalorder %s24, 0
      %p121 = por %p119, %p120
      %s122 = ssub.s32 %s25, %s37
      %s123 = ssub.s32 %s26, %s33
      %s124 = sor.u32 %s122, %s123
      %p125 = scmp.eq.s32.totalorder %s124, 0
      %s127 = sadd.s32 %s126, 1
      %s128 = scalar_select %p125, %s126, %s127
      %p131 = pneg %p125
      %p132 = scmp.eq.s32.totalorder %s18, 1
      %p133 = por %p131, %p132
      %p134 = scmp.ne.s32.totalorder %s126, %s129
      %p135 = scmp.eq.s32.totalorder %s18, 0
      %p136 = por %p134, %p135
      %p137 = scmp.ne.s32.totalorder %s126, %s129
      %p138 = scmp.eq.s32.totalorder %s23, 1
      %p139 = por %p137, %p138
      %p140 = scmp.ne.s32.totalorder %s129, %s130
      %p141 = scmp.eq.s32.totalorder %s23, 0
      %p142 = por %p140, %p141
      %p143 = scmp.ne.s32.totalorder %s129, %s130
      %p144 = scmp.eq.s32.totalorder %s24, 1
      %p145 = por %p143, %p144
      %p147 = scmp.ne.s32.totalorder %s130, %s146
      %p148 = scmp.eq.s32.totalorder %s24, 0
      %p149 = por %p147, %p148
      %s150 = ssub.s32 %s25, %s37
      %s151 = ssub.s32 %s26, %s33
      %s152 = sor.u32 %s150, %s151
      %p153 = scmp.eq.s32.totalorder %s152, 0
      %s155 = sadd.s32 %s154, 1
      %s156 = scalar_select %p153, %s154, %s155
      %p159 = pneg %p153
      %p160 = scmp.eq.s32.totalorder %s18, 1
      %p161 = por %p159, %p160
      %p162 = scmp.ne.s32.totalorder %s154, %s157
      %p163 = scmp.eq.s32.totalorder %s18, 0
      %p164 = por %p162, %p163
      %p165 = scmp.ne.s32.totalorder %s154, %s157
      %p166 = scmp.eq.s32.totalorder %s23, 1
      %p167 = por %p165, %p166
      %p168 = scmp.ne.s32.totalorder %s157, %s158
      %p169 = scmp.eq.s32.totalorder %s23, 0
      %p170 = por %p168, %p169
      %p171 = scmp.ne.s32.totalorder %s157, %s158
      %p172 = scmp.eq.s32.totalorder %s24, 1
      %p173 = por %p171, %p172
      %p175 = scmp.ne.s32.totalorder %s158, %s174
      %p176 = scmp.eq.s32.totalorder %s24, 0
      %p177 = por %p175, %p176
      %s178 = ssub.s32 %s25, %s37
      %s179 = ssub.s32 %s26, %s33
      %s180 = sor.u32 %s178, %s179
      %p181 = scmp.eq.s32.totalorder %s180, 0
      %s183 = sadd.s32 %s182, 1
      %s184 = scalar_select %p181, %s182, %s183
      %p187 = pneg %p181
      %p188 = scmp.eq.s32.totalorder %s18, 1
      %p189 = por %p187, %p188
      %p190 = scmp.ne.s32.totalorder %s182, %s185
      %p191 = scmp.eq.s32.totalorder %s18, 0
      %p192 = por %p190, %p191
      %p193 = scmp.ne.s32.totalorder %s182, %s185
      %p194 = scmp.eq.s32.totalorder %s23, 1
      %p195 = por %p193, %p194
      %p196 = scmp.ne.s32.totalorder %s185, %s186
      %p197 = scmp.eq.s32.totalorder %s23, 0
      %p198 = por %p196, %p197
      %p199 = scmp.ne.s32.totalorder %s185, %s186
      %p200 = scmp.eq.s32.totalorder %s24, 1
      %p201 = por %p199, %p200
      %p203 = scmp.ne.s32.totalorder %s186, %s202
      %p204 = scmp.eq.s32.totalorder %s24, 0
      %p205 = por %p203, %p204
      %s206 = ssub.s32 %s25, %s37
      %s207 = ssub.s32 %s26, %s33
      %s208 = sor.u32 %s206, %s207
      %p209 = scmp.eq.s32.totalorder %s208, 0
      %s211 = sadd.s32 %s210, 1
      %s212 = scalar_select %p209, %s210, %s211
      %p215 = pneg %p209
      %p216 = scmp.eq.s32.totalorder %s18, 1
      %p217 = por %p215, %p216
      %p218 = scmp.ne.s32.totalorder %s210, %s213
      %p219 = scmp.eq.s32.totalorder %s18, 0
      %p220 = por %p218, %p219
      %p221 = scmp.ne.s32.totalorder %s210, %s213
      %p222 = scmp.eq.s32.totalorder %s23, 1
      %p223 = por %p221, %p222
      %p224 = scmp.ne.s32.totalorder %s213, %s214
      %p225 = scmp.eq.s32.totalorder %s23, 0
      %p226 = por %p224, %p225
      %p227 = scmp.ne.s32.totalorder %s213, %s214
      %p228 = scmp.eq.s32.totalorder %s24, 1
      %p229 = por %p227, %p228
      %p231 = scmp.ne.s32.totalorder %s214, %s230
      %p232 = scmp.eq.s32.totalorder %s24, 0
      %p233 = por %p231, %p232
      %s234 = ssub.s32 %s25, %s37
      %s235 = ssub.s32 %s26, %s33
      %s236 = sor.u32 %s234, %s235
      %p237 = scmp.eq.s32.totalorder %s236, 0
      %s239 = sadd.s32 %s238, 1
      %s240 = scalar_select %p237, %s238, %s239
      %p243 = pneg %p237
      %p244 = scmp.eq.s32.totalorder %s18, 1
      %p245 = por %p243, %p244
      %p246 = scmp.ne.s32.totalorder %s238, %s241
      %p247 = scmp.eq.s32.totalorder %s18, 0
      %p248 = por %p246, %p247
      %p249 = scmp.ne.s32.totalorder %s238, %s241
      %p250 = scmp.eq.s32.totalorder %s23, 1
      %p251 = por %p249, %p250
      %p252 = scmp.ne.s32.totalorder %s241, %s242
      %p253 = scmp.eq.s32.totalorder %s23, 0
      %p254 = por %p252, %p253
      %p255 = scmp.ne.s32.totalorder %s241, %s242
      %p256 = scmp.eq.s32.totalorder %s24, 1
      %p257 = por %p255, %p256
      %p259 = scmp.ne.s32.totalorder %s242, %s258
      %p260 = scmp.eq.s32.totalorder %s24, 0
      %p261 = por %p259, %p260
      %s262 = ssub.s32 %s25, %s37
      %s263 = ssub.s32 %s26, %s33
      %s264 = sor.u32 %s262, %s263
      %p265 = scmp.eq.s32.totalorder %s264, 0
      %s267 = sadd.s32 %s266, 1
      %s268 = scalar_select %p265, %s266, %s267
      %p271 = pneg %p265
      %p272 = scmp.eq.s32.totalorder %s18, 1
      %p273 = por %p271, %p272
      %p274 = scmp.ne.s32.totalorder %s266, %s269
      %p275 = scmp.eq.s32.totalorder %s18, 0
      %p276 = por %p274, %p275
      %p277 = scmp.ne.s32.totalorder %s266, %s269
      %p278 = scmp.eq.s32.totalorder %s23, 1
      %p279 = por %p277, %p278
      %p280 = scmp.ne.s32.totalorder %s269, %s270
      %p281 = scmp.eq.s32.totalorder %s23, 0
      %p282 = por %p280, %p281
      %p283 = scmp.ne.s32.totalorder %s269, %s270
      %p284 = scmp.eq.s32.totalorder %s24, 1
      %p285 = por %p283, %p284
      %p287 = scmp.ne.s32.totalorder %s270, %s286
      %p288 = scmp.eq.s32.totalorder %s24, 0
      %p289 = por %p287, %p288
      %p290 = scmp.le.s32.totalorder 1, %s18
      %p291 = scmp.lt.s32.totalorder %s18, 3
      %p292 = pnand %p290, %p291
      %p293 = pneg %p292
      // Predicated region
      $region9: #{tpu_custom_call.1} parent=5 // pred_check
        _
      $region10: #{tpu_custom_call.1} parent=5 // pred_check_branch
        %295 = sbr.rel (%p292) target = $region12
      $region11: #{tpu_custom_call.1} parent=5 // pred_region
        %s296 = ssub.s32 %s18, 1
        // Predicated region
        $region13: #{tpu_custom_call.1} parent=11 // pred_check
          %p297 = pneg %p51
        $region14: #{tpu_custom_call.1} parent=11 // pred_check_branch
          %299 = sbr.rel (%p297) target = $region16
        $region15: #{tpu_custom_call.1} parent=11 // pred_region
          _
        $region16: #{tpu_custom_call.1} parent=11 // pred_fallthru
          _
        // Predicated region
        $region17: #{tpu_custom_call.1} parent=11 // pred_check
          %p300 = pneg %p72
        $region18: #{tpu_custom_call.1} parent=11 // pred_check_branch
          %302 = sbr.rel (%p300) target = $region20
        $region19: #{tpu_custom_call.1} parent=11 // pred_region
          _
        $region20: #{tpu_custom_call.1} parent=11 // pred_fallthru
          _
        // Predicated region
        $region21: #{tpu_custom_call.1} parent=11 // pred_check
          %p303 = pneg %p93
        $region22: #{tpu_custom_call.1} parent=11 // pred_check_branch
          %305 = sbr.rel (%p303) target = $region24
        $region23: #{tpu_custom_call.1} parent=11 // pred_region
          _
        $region24: #{tpu_custom_call.1} parent=11 // pred_fallthru
          _
        // Predicated region
        $region25: #{tpu_custom_call.1} parent=11 // pred_check
          %p306 = pneg %p114
        $region26: #{tpu_custom_call.1} parent=11 // pred_check_branch
          %308 = sbr.rel (%p306) target = $region28
        $region27: #{tpu_custom_call.1} parent=11 // pred_region
          _
        $region28: #{tpu_custom_call.1} parent=11 // pred_fallthru
          _
      $region12: #{tpu_custom_call.1} parent=5 // pred_fallthru
        _
      %p309 = scmp.lt.s32.totalorder %s18, 2
      // Predicated region
      $region29: #{tpu_custom_call.1} parent=5 // pred_check
        %p310 = pneg %p309
      $region30: #{tpu_custom_call.1} parent=5 // pred_check_branch
        %312 = sbr.rel (%p310) target = $region32
      $region31: #{tpu_custom_call.1} parent=5 // pred_region
        // Predicated region
        $region33: #{tpu_custom_call.1} parent=31 // pred_check
          %p313 = pneg %p136
        $region34: #{tpu_custom_call.1} parent=31 // pred_check_branch
          %315 = sbr.rel (%p313) target = $region36
        $region35: #{tpu_custom_call.1} parent=31 // pred_region
          %p316 = scmp.lt.s32.totalorder %s25, 1
          %s317 = scalar_select %p316, %s25, 1
          %p318 = scmp.lt.s32.totalorder %s26, 0
          %s319 = scalar_select %p318, %s26, 0
          %s320 = smul.addr %s317, 4
          %s321 = sadd.s32 %s319, %s320
          %s322 = smul.addr %s321, 8
          %s323 = scalar_lea.vmem %s4, %s322
        $region36: #{tpu_custom_call.1} parent=31 // pred_fallthru
          _
        // Predicated region
        $region37: #{tpu_custom_call.1} parent=31 // pred_check
          %p324 = pneg %p164
        $region38: #{tpu_custom_call.1} parent=31 // pred_check_branch
          %326 = sbr.rel (%p324) target = $region40
        $region39: #{tpu_custom_call.1} parent=31 // pred_region
          %p327 = scmp.lt.s32.totalorder %s25, 1
          %s328 = scalar_select %p327, %s25, 1
          %p329 = scmp.lt.s32.totalorder %s26, 0
          %s330 = scalar_select %p329, %s26, 0
          %s331 = smul.addr %s328, 4
          %s332 = sadd.s32 %s330, %s331
          %s333 = smul.addr %s332, 8
          %s334 = scalar_lea.vmem %s5, %s333
        $region40: #{tpu_custom_call.1} parent=31 // pred_fallthru
          _
        // Predicated region
        $region41: #{tpu_custom_call.1} parent=31 // pred_check
          %p335 = pneg %p192
        $region42: #{tpu_custom_call.1} parent=31 // pred_check_branch
          %337 = sbr.rel (%p335) target = $region44
        $region43: #{tpu_custom_call.1} parent=31 // pred_region
          %p338 = scmp.lt.s32.totalorder %s25, 1
          %s339 = scalar_select %p338, %s25, 1
          %p340 = scmp.lt.s32.totalorder %s26, 0
          %s341 = scalar_select %p340, %s26, 0
          %s342 = smul.addr %s339, 4
          %s343 = sadd.s32 %s341, %s342
          %s344 = smul.addr %s343, 8
          %s345 = scalar_lea.vmem %s6, %s344
        $region44: #{tpu_custom_call.1} parent=31 // pred_fallthru
          _
        // Predicated region
        $region45: #{tpu_custom_call.1} parent=31 // pred_check
          %p346 = pneg %p220
        $region46: #{tpu_custom_call.1} parent=31 // pred_check_branch
          %348 = sbr.rel (%p346) target = $region48
        $region47: #{tpu_custom_call.1} parent=31 // pred_region
          %p349 = scmp.lt.s32.totalorder %s25, 1
          %s350 = scalar_select %p349, %s25, 1
          %p351 = scmp.lt.s32.totalorder %s26, 0
          %s352 = scalar_select %p351, %s26, 0
          %s353 = smul.addr %s350, 8
          %s354 = sadd.s32 %s352, %s353
          %s355 = smul.addr %s354, 8
          %s356 = scalar_lea.vmem %s7, %s355
        $region48: #{tpu_custom_call.1} parent=31 // pred_fallthru
          _
        // Predicated region
        $region49: #{tpu_custom_call.1} parent=31 // pred_check
          %p357 = pneg %p248
        $region50: #{tpu_custom_call.1} parent=31 // pred_check_branch
          %359 = sbr.rel (%p357) target = $region52
        $region51: #{tpu_custom_call.1} parent=31 // pred_region
          %p360 = scmp.lt.s32.totalorder %s25, 1
          %s361 = scalar_select %p360, %s25, 1
          %p362 = scmp.lt.s32.totalorder %s26, 0
          %s363 = scalar_select %p362, %s26, 0
          %s364 = sadd.s32 %s363, %s361
          %s365 = scalar_lea.vmem %s8, %s364
        $region52: #{tpu_custom_call.1} parent=31 // pred_fallthru
          _
      $region32: #{tpu_custom_call.1} parent=5 // pred_fallthru
        _
      %p366 = scmp.le.s32.totalorder 1, %s18
      %p367 = scmp.lt.s32.totalorder %s18, 3
      %p368 = pnand %p366, %p367
      %p369 = pneg %p368
      // Predicated region
      $region53: #{tpu_custom_call.1} parent=5 // pred_check
        _
      $region54: #{tpu_custom_call.1} parent=5 // pred_check_branch
        %371 = sbr.rel (%p368) target = $region56
      $region55: #{tpu_custom_call.1} parent=5 // pred_region
        %s372 = ssub.s32 %s18, 1
        %p373 = pneg %p51
        %p374 = pneg %p48
        %p375 = pneg %p72
        %p376 = pneg %p69
        %p377 = pneg %p93
        %p378 = pneg %p90
        %p379 = pneg %p114
        %p380 = pneg %p111
        %p381 = scmp.lt.s32.totalorder %s27, 1
        %s382 = scalar_select %p381, %s27, 1
        %p383 = scmp.lt.s32.totalorder %s28, 0
        %s384 = scalar_select %p383, %s28, 0
        %s385 = smul.addr %s382, 4
        %s386 = sadd.s32 %s384, %s385
        %s387 = smul.addr %s386, 8
        %s388 = scalar_lea.vmem %s4, %s387
        %p389 = pneg %p142
        %p390 = pneg %p139
        %p391 = scmp.lt.s32.totalorder %s27, 1
        %s392 = scalar_select %p391, %s27, 1
        %p393 = scmp.lt.s32.totalorder %s28, 0
        %s394 = scalar_select %p393, %s28, 0
        %s395 = smul.addr %s392, 4
        %s396 = sadd.s32 %s394, %s395
        %s397 = smul.addr %s396, 8
        %s398 = scalar_lea.vmem %s5, %s397
        %p399 = pneg %p170
        %p400 = pneg %p167
        %p401 = scmp.lt.s32.totalorder %s27, 1
        %s402 = scalar_select %p401, %s27, 1
        %p403 = scmp.lt.s32.totalorder %s28, 0
        %s404 = scalar_select %p403, %s28, 0
        %s405 = smul.addr %s402, 4
        %s406 = sadd.s32 %s404, %s405
        %s407 = smul.addr %s406, 8
        %s408 = scalar_lea.vmem %s6, %s407
        %p409 = pneg %p198
        %p410 = pneg %p195
        %p411 = scmp.lt.s32.totalorder %s27, 1
        %s412 = scalar_select %p411, %s27, 1
        %p413 = scmp.lt.s32.totalorder %s28, 0
        %s414 = scalar_select %p413, %s28, 0
        %s415 = smul.addr %s412, 8
        %s416 = sadd.s32 %s414, %s415
        %s417 = smul.addr %s416, 8
        %s418 = scalar_lea.vmem %s7, %s417
        %p419 = pneg %p226
        %p420 = pneg %p223
        %p421 = scmp.lt.s32.totalorder %s27, 1
        %s422 = scalar_select %p421, %s27, 1
        %p423 = scmp.lt.s32.totalorder %s28, 0
        %s424 = scalar_select %p423, %s28, 0
        %s425 = sadd.s32 %s424, %s422
        %s426 = scalar_lea.vmem %s8, %s425
        %p427 = pneg %p254
        %p428 = pneg %p251
        %p429 = pneg %p282
        %p430 = pneg %p279
        %s431 = sand.u32 %s269, 1
        %s432 = scalar_lea.sflag [#allocation3], %s431
        %s433 = sand.u32 %s269, 1
        %s434 = smul.addr %s433, 2
        %s435 = scalar_lea.vmem [#allocation2], %s434
        %p436 = scmp.lt.s32.totalorder %s27, 1
        %s437 = scalar_select %p436, %s27, 1
        %p438 = scmp.lt.s32.totalorder %s28, 0
        %s439 = scalar_select %p438, %s28, 0
        %s440 = smul.addr %s437, 4
        %s441 = sadd.s32 %s439, %s440
        %s442 = smul.addr %s441, 8
        %s443 = scalar_lea.vmem %s4, %s442
        %p444 = scmp.lt.s32.totalorder %s27, 1
        %s445 = scalar_select %p444, %s27, 1
        %p446 = scmp.lt.s32.totalorder %s28, 0
        %s447 = scalar_select %p446, %s28, 0
        %s448 = smul.addr %s445, 4
        %s449 = sadd.s32 %s447, %s448
        %s450 = smul.addr %s449, 8
        %s451 = scalar_lea.vmem %s5, %s450
        %p452 = scmp.lt.s32.totalorder %s27, 1
        %s453 = scalar_select %p452, %s27, 1
        %p454 = scmp.lt.s32.totalorder %s28, 0
        %s455 = scalar_select %p454, %s28, 0
        %s456 = smul.addr %s453, 4
        %s457 = sadd.s32 %s455, %s456
        %s458 = smul.addr %s457, 8
        %s459 = scalar_lea.vmem %s6, %s458
        %p460 = scmp.lt.s32.totalorder %s27, 1
        %s461 = scalar_select %p460, %s27, 1
        %p462 = scmp.lt.s32.totalorder %s28, 0
        %s463 = scalar_select %p462, %s28, 0
        %s464 = smul.addr %s461, 8
        %s465 = sadd.s32 %s463, %s464
        %s466 = smul.addr %s465, 8
        %s467 = scalar_lea.vmem %s7, %s466
        %p468 = scmp.lt.s32.totalorder %s27, 1
        %s469 = scalar_select %p468, %s27, 1
        %p470 = scmp.lt.s32.totalorder %s28, 0
        %s471 = scalar_select %p470, %s28, 0
        %s472 = sadd.s32 %s471, %s469
        %s473 = scalar_lea.vmem %s8, %s472
        %v474 = vld [vmem:[%s0] sm:$0x3]
        %v475 = vld [vmem:[%s443] sm:$0xff]
        %v476 = vld [vmem:[%s443 + $0x8] sm:$0xff]
        %v477 = vld [vmem:[%s443 + $0x10] sm:$0xff]
        %v478 = vld [vmem:[%s443 + $0x18] sm:$0xff]
        %v479 = vld [vmem:[%s1] sm:$0x3]
        %v480 = vld [vmem:[%s451] sm:$0xff]
        %v481 = vld [vmem:[%s451 + $0x8] sm:$0xff]
        %v482 = vld [vmem:[%s451 + $0x10] sm:$0xff]
        %v483 = vld [vmem:[%s451 + $0x18] sm:$0xff]
        %vm484 = vcmask 261120
        %v486 = vsel %vm484, %v479, 0
        %488 = vmatprep.subr.mxu0 0.0
        %489 = vmatpush1.msra.mxu0 %v480
        %490 = vmatprep.subr.mxu0 0.0
        %491 = vmatpush1.msra.mxu0 %v481
        %492 = vmatprep.subr.mxu0 0.0
        %493 = vmatpush1.msra.mxu0 %v482
        %494 = vmatprep.subr.mxu0 0.0
        %495 = vmatpush1.msra.mxu0 %v483
        %496 = vmatprep.subr.mxu0 0.0
        %497 = vmatpush1.msra.mxu0 0.0
        %498 = vmatprep.subr.mxu0 0.0
        %499 = vmatpush1.msra.mxu0 0.0
        %500 = vmatprep.subr.mxu0 0.0
        %501 = vmatpush1.msra.mxu0 0.0
        %502 = vmatprep.subr.mxu0 0.0
        %503 = vmatpush1.msra.mxu0 0.0
        %504 = vmatprep.subr.mxu0 0.0
        %505 = vmatpush1.msra.mxu0 0.0
        %506 = vmatprep.subr.mxu0 0.0
        %507 = vmatpush1.msra.mxu0 0.0
        %508 = vmatprep.subr.mxu0 0.0
        %509 = vmatpush1.msra.mxu0 0.0
        %510 = vmatprep.subr.mxu0 0.0
        %511 = vmatpush1.msra.mxu0 0.0
        %512 = vmatprep.subr.mxu0 0.0
        %513 = vmatpush1.msra.mxu0 0.0
        %514 = vmatprep.subr.mxu0 0.0
        %515 = vmatpush1.msra.mxu0 0.0
        %516 = vmatprep.subr.mxu0 0.0
        %517 = vmatpush1.msra.mxu0 0.0
        %518 = vmatprep.subr.mxu0 0.0
        %519 = vmatpush1.msra.mxu0 0.0
        %520 = vmatprep.subr.mxu0 0.0
        %521 = vmatpush1.msra.mxu0 0.0
        %522 = vmatprep.subr.mxu0 0.0
        %523 = vmatpush1.msra.mxu0 0.0
        %524 = vmatprep.subr.mxu0 0.0
        %525 = vmatpush1.msra.mxu0 0.0
        %526 = vmatprep.subr.mxu0 0.0
        %527 = vmatpush1.msra.mxu0 0.0
        %528 = vmatprep.subr.mxu0 0.0
        %529 = vmatpush1.msra.mxu0 0.0
        %530 = vmatprep.subr.mxu0 0.0
        %531 = vmatpush1.msra.mxu0 0.0
        %532 = vmatprep.subr.mxu0 0.0
        %533 = vmatpush1.msra.mxu0 0.0
        %534 = vmatprep.subr.mxu0 0.0
        %535 = vmatpush1.msra.mxu0 0.0
        %536 = vmatprep.subr.mxu0 0.0
        %537 = vmatpush1.msra.mxu0 0.0
        %538 = vmatprep.subr.mxu0 0.0
        %539 = vmatpush1.msra.mxu0 0.0
        %540 = vmatprep.subr.mxu0 0.0
        %541 = vmatpush1.msra.mxu0 0.0
        %542 = vmatprep.subr.mxu0 0.0
        %543 = vmatpush1.msra.mxu0 0.0
        %544 = vmatprep.subr.mxu0 0.0
        %545 = vmatpush1.msra.mxu0 0.0
        %546 = vmatprep.subr.mxu0 0.0
        %547 = vmatpush1.msra.mxu0 0.0
        %548 = vmatprep.subr.mxu0 0.0
        %549 = vmatpush1.msra.mxu0 0.0
        %550 = vmatprep.subr.mxu0 0.0
        %551 = vmatpush1.msra.mxu0 0.0
        %552 = vmatprep.mubr.f32.mxu0 0.0
        %553 = vmatmul.mubr.f32.gmra.mrb[0].mxu0 %v486
        %v554 = vpop.f32.mrb[0].mxu0
        %v555 = vadd.f32 0.0, %v554
        %v556 = vpop.f32.mrb[0].mxu0
        %557 = vdwg.mxu0
        %v559 = vsel %vm484, %v474, 0
        %561 = vmatprep.subr.mxu0 0.0
        %562 = vmatpush1.msra.mxu0 %v475
        %563 = vmatprep.subr.mxu0 0.0
        %564 = vmatpush1.msra.mxu0 %v476
        %565 = vmatprep.subr.mxu0 0.0
        %566 = vmatpush1.msra.mxu0 %v477
        %567 = vmatprep.subr.mxu0 0.0
        %568 = vmatpush1.msra.mxu0 %v478
        %569 = vmatprep.subr.mxu0 0.0
        %570 = vmatpush1.msra.mxu0 0.0
        %571 = vmatprep.subr.mxu0 0.0
        %572 = vmatpush1.msra.mxu0 0.0
        %573 = vmatprep.subr.mxu0 0.0
        %574 = vmatpush1.msra.mxu0 0.0
        %575 = vmatprep.subr.mxu0 0.0
        %576 = vmatpush1.msra.mxu0 0.0
        %577 = vmatprep.subr.mxu0 0.0
        %578 = vmatpush1.msra.mxu0 0.0
        %579 = vmatprep.subr.mxu0 0.0
        %580 = vmatpush1.msra.mxu0 0.0
        %581 = vmatprep.subr.mxu0 0.0
        %582 = vmatpush1.msra.mxu0 0.0
        %583 = vmatprep.subr.mxu0 0.0
        %584 = vmatpush1.msra.mxu0 0.0
        %585 = vmatprep.subr.mxu0 0.0
        %586 = vmatpush1.msra.mxu0 0.0
        %587 = vmatprep.subr.mxu0 0.0
        %588 = vmatpush1.msra.mxu0 0.0
        %589 = vmatprep.subr.mxu0 0.0
        %590 = vmatpush1.msra.mxu0 0.0
        %591 = vmatprep.subr.mxu0 0.0
        %592 = vmatpush1.msra.mxu0 0.0
        %593 = vmatprep.subr.mxu0 0.0
        %594 = vmatpush1.msra.mxu0 0.0
        %595 = vmatprep.subr.mxu0 0.0
        %596 = vmatpush1.msra.mxu0 0.0
        %597 = vmatprep.subr.mxu0 0.0
        %598 = vmatpush1.msra.mxu0 0.0
        %599 = vmatprep.subr.mxu0 0.0
        %600 = vmatpush1.msra.mxu0 0.0
        %601 = vmatprep.subr.mxu0 0.0
        %602 = vmatpush1.msra.mxu0 0.0
        %603 = vmatprep.subr.mxu0 0.0
        %604 = vmatpush1.msra.mxu0 0.0
        %605 = vmatprep.subr.mxu0 0.0
        %606 = vmatpush1.msra.mxu0 0.0
        %607 = vmatprep.subr.mxu0 0.0
        %608 = vmatpush1.msra.mxu0 0.0
        %609 = vmatprep.subr.mxu0 0.0
        %610 = vmatpush1.msra.mxu0 0.0
        %611 = vmatprep.subr.mxu0 0.0
        %612 = vmatpush1.msra.mxu0 0.0
        %613 = vmatprep.subr.mxu0 0.0
        %614 = vmatpush1.msra.mxu0 0.0
        %615 = vmatprep.subr.mxu0 0.0
        %616 = vmatpush1.msra.mxu0 0.0
        %617 = vmatprep.subr.mxu0 0.0
        %618 = vmatpush1.msra.mxu0 0.0
        %619 = vmatprep.subr.mxu0 0.0
        %620 = vmatpush1.msra.mxu0 0.0
        %621 = vmatprep.subr.mxu0 0.0
        %622 = vmatpush1.msra.mxu0 0.0
        %623 = vmatprep.subr.mxu0 0.0
        %624 = vmatpush1.msra.mxu0 0.0
        %625 = vmatprep.mubr.f32.mxu0 0.0
        %626 = vmatmul.mubr.f32.gmra.mrb[0].mxu0 %v559
        %v627 = vpop.f32.mrb[0].mxu0
        %v628 = vadd.f32 %v555, %v627
        %v629 = vpop.f32.mrb[0].mxu0
        %630 = vdwg.mxu0
        %v631 = vld [vmem:[%s2] sm:$0x3]
        %v632 = vld [vmem:[%s459] sm:$0xff]
        %v633 = vld [vmem:[%s459 + $0x8] sm:$0xff]
        %v634 = vld [vmem:[%s459 + $0x10] sm:$0xff]
        %v635 = vld [vmem:[%s459 + $0x18] sm:$0xff]
        %v637 = vsel %vm484, %v631, 0
        %639 = vmatprep.subr.mxu0 0.0
        %640 = vmatpush1.msra.mxu0 %v632
        %641 = vmatprep.subr.mxu0 0.0
        %642 = vmatpush1.msra.mxu0 %v633
        %643 = vmatprep.subr.mxu0 0.0
        %644 = vmatpush1.msra.mxu0 %v634
        %645 = vmatprep.subr.mxu0 0.0
        %646 = vmatpush1.msra.mxu0 %v635
        %647 = vmatprep.subr.mxu0 0.0
        %648 = vmatpush1.msra.mxu0 0.0
        %649 = vmatprep.subr.mxu0 0.0
        %650 = vmatpush1.msra.mxu0 0.0
        %651 = vmatprep.subr.mxu0 0.0
        %652 = vmatpush1.msra.mxu0 0.0
        %653 = vmatprep.subr.mxu0 0.0
        %654 = vmatpush1.msra.mxu0 0.0
        %655 = vmatprep.subr.mxu0 0.0
        %656 = vmatpush1.msra.mxu0 0.0
        %657 = vmatprep.subr.mxu0 0.0
        %658 = vmatpush1.msra.mxu0 0.0
        %659 = vmatprep.subr.mxu0 0.0
        %660 = vmatpush1.msra.mxu0 0.0
        %661 = vmatprep.subr.mxu0 0.0
        %662 = vmatpush1.msra.mxu0 0.0
        %663 = vmatprep.subr.mxu0 0.0
        %664 = vmatpush1.msra.mxu0 0.0
        %665 = vmatprep.subr.mxu0 0.0
        %666 = vmatpush1.msra.mxu0 0.0
        %667 = vmatprep.subr.mxu0 0.0
        %668 = vmatpush1.msra.mxu0 0.0
        %669 = vmatprep.subr.mxu0 0.0
        %670 = vmatpush1.msra.mxu0 0.0
        %671 = vmatprep.subr.mxu0 0.0
        %672 = vmatpush1.msra.mxu0 0.0
        %673 = vmatprep.subr.mxu0 0.0
        %674 = vmatpush1.msra.mxu0 0.0
        %675 = vmatprep.subr.mxu0 0.0
        %676 = vmatpush1.msra.mxu0 0.0
        %677 = vmatprep.subr.mxu0 0.0
        %678 = vmatpush1.msra.mxu0 0.0
        %679 = vmatprep.subr.mxu0 0.0
        %680 = vmatpush1.msra.mxu0 0.0
        %681 = vmatprep.subr.mxu0 0.0
        %682 = vmatpush1.msra.mxu0 0.0
        %683 = vmatprep.subr.mxu0 0.0
        %684 = vmatpush1.msra.mxu0 0.0
        %685 = vmatprep.subr.mxu0 0.0
        %686 = vmatpush1.msra.mxu0 0.0
        %687 = vmatprep.subr.mxu0 0.0
        %688 = vmatpush1.msra.mxu0 0.0
        %689 = vmatprep.subr.mxu0 0.0
        %690 = vmatpush1.msra.mxu0 0.0
        %691 = vmatprep.subr.mxu0 0.0
        %692 = vmatpush1.msra.mxu0 0.0
        %693 = vmatprep.subr.mxu0 0.0
        %694 = vmatpush1.msra.mxu0 0.0
        %695 = vmatprep.subr.mxu0 0.0
        %696 = vmatpush1.msra.mxu0 0.0
        %697 = vmatprep.subr.mxu0 0.0
        %698 = vmatpush1.msra.mxu0 0.0
        %699 = vmatprep.subr.mxu0 0.0
        %700 = vmatpush1.msra.mxu0 0.0
        %701 = vmatprep.subr.mxu0 0.0
        %702 = vmatpush1.msra.mxu0 0.0
        %703 = vmatprep.mubr.f32.mxu0 0.0
        %704 = vmatmul.mubr.f32.gmra.mrb[0].mxu0 %v637
        %v705 = vpop.f32.mrb[0].mxu0
        %v706 = vadd.f32 0.0, %v705
        %v707 = vpop.f32.mrb[0].mxu0
        %708 = vdwg.mxu0
        %v709 = vadd.f32 %v628, %v706
        %v710 = vld [vmem:[%s3] sm:$0x3]
        %v711 = vld [vmem:[%s467] sm:$0xff]
        %v712 = vld [vmem:[%s467 + $0x8] sm:$0xff]
        %v713 = vld [vmem:[%s467 + $0x10] sm:$0xff]
        %v714 = vld [vmem:[%s467 + $0x18] sm:$0xff]
        %v715 = vld [vmem:[%s467 + $0x20] sm:$0xff]
        %v716 = vld [vmem:[%s467 + $0x28] sm:$0xff]
        %v717 = vld [vmem:[%s467 + $0x30] sm:$0xff]
        %v718 = vld [vmem:[%s467 + $0x38] sm:$0xff]
        %vm719 = vcmask 523264
        %v721 = vsel %vm719, %v710, 0
        %723 = vmatprep.subr.mxu0 0.0
        %724 = vmatpush1.msra.mxu0 %v711
        %725 = vmatprep.subr.mxu0 0.0
        %726 = vmatpush1.msra.mxu0 %v712
        %727 = vmatprep.subr.mxu0 0.0
        %728 = vmatpush1.msra.mxu0 %v713
        %729 = vmatprep.subr.mxu0 0.0
        %730 = vmatpush1.msra.mxu0 %v714
        %731 = vmatprep.subr.mxu0 0.0
        %732 = vmatpush1.msra.mxu0 %v715
        %733 = vmatprep.subr.mxu0 0.0
        %734 = vmatpush1.msra.mxu0 %v716
        %735 = vmatprep.subr.mxu0 0.0
        %736 = vmatpush1.msra.mxu0 %v717
        %737 = vmatprep.subr.mxu0 0.0
        %738 = vmatpush1.msra.mxu0 %v718
        %739 = vmatprep.subr.mxu0 0.0
        %740 = vmatpush1.msra.mxu0 0.0
        %741 = vmatprep.subr.mxu0 0.0
        %742 = vmatpush1.msra.mxu0 0.0
        %743 = vmatprep.subr.mxu0 0.0
        %744 = vmatpush1.msra.mxu0 0.0
        %745 = vmatprep.subr.mxu0 0.0
        %746 = vmatpush1.msra.mxu0 0.0
        %747 = vmatprep.subr.mxu0 0.0
        %748 = vmatpush1.msra.mxu0 0.0
        %749 = vmatprep.subr.mxu0 0.0
        %750 = vmatpush1.msra.mxu0 0.0
        %751 = vmatprep.subr.mxu0 0.0
        %752 = vmatpush1.msra.mxu0 0.0
        %753 = vmatprep.subr.mxu0 0.0
        %754 = vmatpush1.msra.mxu0 0.0
        %755 = vmatprep.subr.mxu0 0.0
        %756 = vmatpush1.msra.mxu0 0.0
        %757 = vmatprep.subr.mxu0 0.0
        %758 = vmatpush1.msra.mxu0 0.0
        %759 = vmatprep.subr.mxu0 0.0
        %760 = vmatpush1.msra.mxu0 0.0
        %761 = vmatprep.subr.mxu0 0.0
        %762 = vmatpush1.msra.mxu0 0.0
        %763 = vmatprep.subr.mxu0 0.0
        %764 = vmatpush1.msra.mxu0 0.0
        %765 = vmatprep.subr.mxu0 0.0
        %766 = vmatpush1.msra.mxu0 0.0
        %767 = vmatprep.subr.mxu0 0.0
        %768 = vmatpush1.msra.mxu0 0.0
        %769 = vmatprep.subr.mxu0 0.0
        %770 = vmatpush1.msra.mxu0 0.0
        %771 = vmatprep.subr.mxu0 0.0
        %772 = vmatpush1.msra.mxu0 0.0
        %773 = vmatprep.subr.mxu0 0.0
        %774 = vmatpush1.msra.mxu0 0.0
        %775 = vmatprep.subr.mxu0 0.0
        %776 = vmatpush1.msra.mxu0 0.0
        %777 = vmatprep.subr.mxu0 0.0
        %778 = vmatpush1.msra.mxu0 0.0
        %779 = vmatprep.subr.mxu0 0.0
        %780 = vmatpush1.msra.mxu0 0.0
        %781 = vmatprep.subr.mxu0 0.0
        %782 = vmatpush1.msra.mxu0 0.0
        %783 = vmatprep.subr.mxu0 0.0
        %784 = vmatpush1.msra.mxu0 0.0
        %785 = vmatprep.subr.mxu0 0.0
        %786 = vmatpush1.msra.mxu0 0.0
        %787 = vmatprep.mubr.f32.mxu0 0.0
        %788 = vmatmul.mubr.f32.gmra.mrb[0].mxu0 %v721
        %v789 = vpop.f32.mrb[0].mxu0
        %v790 = vadd.f32 0.0, %v789
        %v791 = vpop.f32.mrb[0].mxu0
        %792 = vdwg.mxu0
        %v793 = vadd.f32 %v709, %v790
        %v794 = vld [vmem:[%s473] sm:$0x1]
        %v796 = vlaneseq
        %v797 = vshrl.u32 %v796, 7
        %v798 = vsub.s32 0, %v797
        %v799 = vrot.slane %v794, %v798
        %v801 = vmul.f32 %v793, %v799
        %v802 = vsub.f32 1.0, %v794
        %v803 = vmul.f32 %v802, -1e+30
        %v805 = vlaneseq
        %v806 = vshrl.u32 %v805, 7
        %v807 = vsub.s32 0, %v806
        %v808 = vrot.slane %v803, %v807
        %v810 = vadd.f32 %v801, %v808
        %vm811 = vcmask 123904
        %812 = vst.msk [vmem:[%s435] sm:$0x3] %vm811, %v810
        %s813 = sand.u32 %s269, 1
        %s814 = scalar_lea.sflag [#allocation3], %s813
        %s815 = sand.u32 %s269, 1
        %s816 = smul.addr %s815, 2
        %s817 = scalar_lea.vmem [#allocation2], %s816
        // Predicated region
        $region57: #{tpu_custom_call.1} parent=55 // pred_check
          %p818 = pneg %p279
        $region58: #{tpu_custom_call.1} parent=55 // pred_check_branch
          %820 = sbr.rel (%p818) target = $region60
        $region59: #{tpu_custom_call.1} parent=55 // pred_region
          %s822 = ssub.s32 32, 32
          %823 = vsyncadd %s814, %s822
          %s824 = sadd.s32 %s28, %s27
          %s825 = smul.addr %s824, 32
          %s826 = scalar_lea.hbm %s9, %s825
          %s828 = sshll.u32 %s817, 4
          %s829 = int_to_ptr.vmem [resolvable:$true] %s828
          %831 = dma.vmem_to_hbm [thread:$0]  %s829, 32, %s826, %s814
        $region60: #{tpu_custom_call.1} parent=55 // pred_fallthru
          _
      $region56: #{tpu_custom_call.1} parent=5 // pred_fallthru
        _
      %p832 = scmp.le.s32.totalorder 2, %s18
      // Predicated region
      $region61: #{tpu_custom_call.1} parent=5 // pred_check
        %p833 = pneg %p832
      $region62: #{tpu_custom_call.1} parent=5 // pred_check_branch
        %835 = sbr.rel (%p833) target = $region64
      $region63: #{tpu_custom_call.1} parent=5 // pred_region
        %s836 = ssub.s32 %s18, 2
        // Predicated region
        $region65: #{tpu_custom_call.1} parent=63 // pred_check
          %p837 = pneg %p285
        $region66: #{tpu_custom_call.1} parent=63 // pred_check_branch
          %839 = sbr.rel (%p837) target = $region68
        $region67: #{tpu_custom_call.1} parent=63 // pred_region
          %s840 = sand.u32 %s270, 1
          %s841 = scalar_lea.sflag [#allocation3], %s840
          %s842 = sand.u32 %s270, 1
          %s843 = smul.addr %s842, 2
          %s844 = scalar_lea.vmem [#allocation2], %s843
          %845 = dma.done %s841, 32
        $region68: #{tpu_custom_call.1} parent=63 // pred_fallthru
          _
      $region64: #{tpu_custom_call.1} parent=5 // pred_fallthru
        _
    $region6: #{tpu_custom_call.1} parent=1 // loop_footer
      %s22 = sadd.s32 1, %s18
    $region7: #{tpu_custom_call.1} parent=1 // loop_footer_branch
      %17 = sbr.rel target = $region3
    $region8: #{tpu_custom_call.1} parent=1 // loop_exit
      _
    %846 = vsyncpa [#allocation3], 1
    %s847 = scalar_lea.sflag [#allocation3], 1
    %848 = vsyncpa %s847, 1

</llo_original>
